<compile_context>
chip_gen: v5e
topology: v5e:2x2
jax: 0.10.0
libtpu: 0.0.40
codegen_flags: <defaults>
</compile_context>

<pallas_src>
import jax
import jax.numpy as jnp
from jax.experimental import pallas as pl
from jax.experimental.pallas import tpu as pltpu


IN_CH = 32
HID_CH = 64
OUT_CH = 16
N_ROWS = 16
MAX_TILE_M = 2048        # row tile for large N (amortizes per-step overhead)
LN_EPS = 1e-5            # torch.nn.LayerNorm default eps
MXU_DTYPE = jnp.bfloat16  # matmul operand dtype (f32 accumulation on MXU)


def _layernorm(h, gamma, beta):
    """LayerNorm over the feature axis, biased variance (matches torch).
    One-pass statistics: E[x] and E[x^2] are independent XLU reductions."""
    mu = jnp.mean(h, axis=-1, keepdims=True)
    ms = jnp.mean(h * h, axis=-1, keepdims=True)
    var = ms - mu * mu
    return (h - mu) * jax.lax.rsqrt(var + LN_EPS) * gamma + beta


def mlp_kernel(x_ref, w0_ref, w1_ref, w2_ref, vec_ref, o_ref):
    # Packed parameter vectors: one (8, HID_CH) f32 tile.
    #   row 0: b0   row 1: g0   row 2: be0
    #   row 3: b1   row 4: g1   row 5: be1
    #   row 6: b2 (first OUT_CH cols)        row 7: unused (zeros)
    vecs = vec_ref[...]
    b0 = vecs[0:1, :]
    g0 = vecs[1:2, :]
    be0 = vecs[2:3, :]
    b1 = vecs[3:4, :]
    g1 = vecs[4:5, :]
    be1 = vecs[5:6, :]
    b2 = vecs[6:7, :OUT_CH]

    # normalizations[0] is Identity (InputNorm=False).
    # bf16 cast of the input happens here (no wrapper-side pass over x).
    x = x_ref[...].astype(MXU_DTYPE)

    # --- layer 0: Linear -> ReLU -> LayerNorm -> dropout(eval)=id ---
    h = jnp.dot(x, w0_ref[...], preferred_element_type=jnp.float32) + b0
    h = jnp.maximum(h, 0.0)
    h = _layernorm(h, g0, be0)

    # --- layer 1: Linear -> ReLU -> LayerNorm -> dropout(eval)=id ---
    h = jnp.dot(h.astype(MXU_DTYPE), w1_ref[...],
                preferred_element_type=jnp.float32) + b1
    h = jnp.maximum(h, 0.0)
    h = _layernorm(h, g1, be1)

    # --- final layer: Linear only, direct (tile_m, OUT_CH) store ---
    o = jnp.dot(h.astype(MXU_DTYPE), w2_ref[...],
                preferred_element_type=jnp.float32) + b2
    o_ref[...] = o.astype(o_ref.dtype)


def pack_params(params):
    """One-time parameter preprocessing (outside the per-call hot path):
    bf16 weight casts + packing the seven small per-channel vectors into a
    single (8, HID_CH) f32 tile (one DMA instead of seven padded ones)."""
    w0, b0, g0, be0, w1, b1, g1, be1, w2, b2 = params
    w0b = w0.astype(MXU_DTYPE)
    w1b = w1.astype(MXU_DTYPE)
    w2b = w2.astype(MXU_DTYPE)
    vecs = jnp.zeros((8, HID_CH), jnp.float32)
    vecs = vecs.at[0, :].set(b0[0])
    vecs = vecs.at[1, :].set(g0[0])
    vecs = vecs.at[2, :].set(be0[0])
    vecs = vecs.at[3, :].set(b1[0])
    vecs = vecs.at[4, :].set(g1[0])
    vecs = vecs.at[5, :].set(be1[0])
    vecs = vecs.at[6, :OUT_CH].set(b2[0])
    return (w0b, w1b, w2b, vecs)


@jax.jit
def mlp_forward(x, packed):
    """Single-dispatch forward: exactly one pallas_call, no pad/cast/slice."""
    w0b, w1b, w2b, vecs = packed
    n = x.shape[0]

    # Row tiling: one grid step covering all rows when n <= MAX_TILE_M
    # (block dim == full array dim is always legal); otherwise 2048-row tiles
    # with a ragged, write-masked last block.
    tile_m = n if n <= MAX_TILE_M else MAX_TILE_M
    grid = (pl.cdiv(n, tile_m),)

    full = lambda shape: pl.BlockSpec(shape, lambda i: (0, 0))
    return pl.pallas_call(
        mlp_kernel,
        out_shape=jax.ShapeDtypeStruct((n, OUT_CH), jnp.float32),
        grid_spec=pltpu.PrefetchScalarGridSpec(
            num_scalar_prefetch=0,
            grid=grid,
            in_specs=[
                pl.BlockSpec((tile_m, IN_CH), lambda i: (i, 0)),  # x row tile
                full((IN_CH, HID_CH)),                            # W0 (bf16)
                full((HID_CH, HID_CH)),                           # W1 (bf16)
                full((HID_CH, OUT_CH)),                           # W2 (bf16)
                full((8, HID_CH)),                                # packed vecs
            ],
            out_specs=pl.BlockSpec((tile_m, OUT_CH), lambda i: (i, 0)),
        ),
        compiler_params=pltpu.CompilerParams(
            dimension_semantics=("parallel",)),
    )(x, w0b, w1b, w2b, vecs)


def init_params(key):
    """Deterministic parameter init mimicking torch defaults (kaiming-uniform
    linears, LayerNorm gamma=1 / beta=0). Weights stored as (F_in, F_out)."""
    def linear(key, fan_in, fan_out):
        kw, kb = jax.random.split(key)
        bound = 1.0 / jnp.sqrt(fan_in)
        w = jax.random.uniform(kw, (fan_in, fan_out), jnp.float32, -bound, bound)
        b = jax.random.uniform(kb, (1, fan_out), jnp.float32, -bound, bound)
        return w, b

    k0, k1, k2 = jax.random.split(key, 3)
    w0, b0 = linear(k0, IN_CH, HID_CH)
    w1, b1 = linear(k1, HID_CH, HID_CH)
    w2, b2 = linear(k2, HID_CH, OUT_CH)
    g0 = jnp.ones((1, HID_CH), jnp.float32)
    be0 = jnp.zeros((1, HID_CH), jnp.float32)
    g1 = jnp.ones((1, HID_CH), jnp.float32)
    be1 = jnp.zeros((1, HID_CH), jnp.float32)
    return (w0, b0, g0, be0, w1, b1, g1, be1, w2, b2)


def mlp_reference_bf16(x, params):
    """JAX reference with the same bf16-operand / f32-accumulate matmuls."""
    w0, b0, g0, be0, w1, b1, g1, be1, w2, b2 = params
    h = jnp.dot(x.astype(MXU_DTYPE), w0.astype(MXU_DTYPE),
                preferred_element_type=jnp.float32) + b0
    h = _layernorm(jnp.maximum(h, 0.0), g0, be0)
    h = jnp.dot(h.astype(MXU_DTYPE), w1.astype(MXU_DTYPE),
                preferred_element_type=jnp.float32) + b1
    h = _layernorm(jnp.maximum(h, 0.0), g1, be1)
    return jnp.dot(h.astype(MXU_DTYPE), w2.astype(MXU_DTYPE),
                   preferred_element_type=jnp.float32) + b2


def mlp_reference_f32(x, params):
    """Full-f32 reference (matches the torch module's math)."""
    w0, b0, g0, be0, w1, b1, g1, be1, w2, b2 = params
    h = _layernorm(jnp.maximum(x @ w0 + b0, 0.0), g0, be0)
    h = _layernorm(jnp.maximum(h @ w1 + b1, 0.0), g1, be1)
    return h @ w2 + b2


if __name__ == "__main__":
    key = jax.random.PRNGKey(0)
    kx, kp = jax.random.split(key)
    x = jax.random.normal(kx, (N_ROWS, IN_CH), jnp.float32)
    params = init_params(kp)
    packed = pack_params(params)

    out = mlp_forward(x, packed)
    out = jax.block_until_ready(out)
    assert out.shape == (N_ROWS, OUT_CH)

    # Exact-path check: same bf16-operand matmul recipe in plain JAX.
    ref_bf16 = mlp_reference_bf16(x, params)
    assert jnp.allclose(out, ref_bf16, atol=2e-3, rtol=2e-3), \
        "mismatch vs bf16-matched JAX reference"

    # Semantics check vs the full-f32 (torch-equivalent) path, within bf16
    # matmul precision.
    ref_f32 = mlp_reference_f32(x, params)
    assert jnp.allclose(out, ref_f32, atol=5e-2, rtol=5e-2), \
        "mismatch vs f32 JAX reference beyond bf16 tolerance"

    print("KERNEL_OK")
</pallas_src>

<mosaic_0001>
module attributes {stable_mosaic.version = 11 : i64} {
  func.func @mlp_kernel(%arg0: i32, %arg1: memref<16x32xf32, #tpu.memory_space<vmem>>, %arg2: memref<32x64xbf16, #tpu.memory_space<vmem>>, %arg3: memref<64x64xbf16, #tpu.memory_space<vmem>>, %arg4: memref<64x16xbf16, #tpu.memory_space<vmem>>, %arg5: memref<8x64xf32, #tpu.memory_space<vmem>>, %arg6: memref<16x16xf32, #tpu.memory_space<vmem>>) attributes {dimension_semantics = [#tpu.dimension_semantics<parallel>], iteration_bounds = array<i64: 1>, scalar_prefetch = 0 : i64, scratch_operands = 0 : i64, tpu.core_type = #tpu.core_type<tc>, window_params = [{transform_indices = @transform_0, window_bounds = array<i64: 16, 32>}, {pipeline_mode = #tpu.pipeline_mode<synchronous>, transform_indices = @transform_1, window_bounds = array<i64: 32, 64>}, {pipeline_mode = #tpu.pipeline_mode<synchronous>, transform_indices = @transform_2, window_bounds = array<i64: 64, 64>}, {pipeline_mode = #tpu.pipeline_mode<synchronous>, transform_indices = @transform_3, window_bounds = array<i64: 64, 16>}, {pipeline_mode = #tpu.pipeline_mode<synchronous>, transform_indices = @transform_4, window_bounds = array<i64: 8, 64>}, {transform_indices = @transform_5, window_bounds = array<i64: 16, 16>}]} {
    %c0 = arith.constant 0 : index
    %c0_0 = arith.constant 0 : index
    %0 = vector.load %arg5[%c0, %c0_0] : memref<8x64xf32, #tpu.memory_space<vmem>>, vector<8x64xf32>
    %1 = vector.extract_strided_slice %0 {offsets = [0, 0], sizes = [1, 64], strides = [1, 1]} : vector<8x64xf32> to vector<1x64xf32>
    %2 = vector.extract_strided_slice %0 {offsets = [1, 0], sizes = [1, 64], strides = [1, 1]} : vector<8x64xf32> to vector<1x64xf32>
    %3 = vector.extract_strided_slice %0 {offsets = [2, 0], sizes = [1, 64], strides = [1, 1]} : vector<8x64xf32> to vector<1x64xf32>
    %4 = vector.extract_strided_slice %0 {offsets = [3, 0], sizes = [1, 64], strides = [1, 1]} : vector<8x64xf32> to vector<1x64xf32>
    %5 = vector.extract_strided_slice %0 {offsets = [4, 0], sizes = [1, 64], strides = [1, 1]} : vector<8x64xf32> to vector<1x64xf32>
    %6 = vector.extract_strided_slice %0 {offsets = [5, 0], sizes = [1, 64], strides = [1, 1]} : vector<8x64xf32> to vector<1x64xf32>
    %7 = vector.extract_strided_slice %0 {offsets = [6, 0], sizes = [1, 16], strides = [1, 1]} : vector<8x64xf32> to vector<1x16xf32>
    %c0_1 = arith.constant 0 : index
    %c0_2 = arith.constant 0 : index
    %8 = vector.load %arg1[%c0_1, %c0_2] : memref<16x32xf32, #tpu.memory_space<vmem>>, vector<16x32xf32>
    %9 = arith.truncf %8 : vector<16x32xf32> to vector<16x32xbf16>
    %c0_3 = arith.constant 0 : index
    %c0_4 = arith.constant 0 : index
    %10 = vector.load %arg2[%c0_3, %c0_4] : memref<32x64xbf16, #tpu.memory_space<vmem>>, vector<32x64xbf16>
    %cst = arith.constant dense<0.000000e+00> : vector<16x64xf32>
    %11 = tpu.matmul %9, %10, %cst {dimension_numbers = #tpu.dot_dimension_numbers<[1], [0], [0], [1], [0, 0, 1, 1], [], []>} : vector<16x32xbf16>, vector<32x64xbf16>, vector<16x64xf32> -> vector<16x64xf32>
    %12 = vector.broadcast %1 : vector<1x64xf32> to vector<16x64xf32>
    %13 = arith.addf %11, %12 : vector<16x64xf32>
    %cst_5 = arith.constant 0.000000e+00 : f32
    %14 = vector.broadcast %cst_5 : f32 to vector<16x64xf32>
    %15 = arith.maximumf %13, %14 : vector<16x64xf32>
    %cst_6 = arith.constant dense<0.000000e+00> : vector<16xf32>
    %16 = vector.multi_reduction <add>, %15, %cst_6 [1] : vector<16x64xf32> to vector<16xf32>
    %17 = vector.shape_cast %16 : vector<16xf32> to vector<16x1xf32>
    %cst_7 = arith.constant 6.400000e+01 : f32
    %18 = vector.broadcast %cst_7 : f32 to vector<16x1xf32>
    %19 = arith.divf %17, %18 : vector<16x1xf32>
    %20 = arith.mulf %15, %15 : vector<16x64xf32>
    %cst_8 = arith.constant dense<0.000000e+00> : vector<16xf32>
    %21 = vector.multi_reduction <add>, %20, %cst_8 [1] : vector<16x64xf32> to vector<16xf32>
    %22 = vector.shape_cast %21 : vector<16xf32> to vector<16x1xf32>
    %cst_9 = arith.constant 6.400000e+01 : f32
    %23 = vector.broadcast %cst_9 : f32 to vector<16x1xf32>
    %24 = arith.divf %22, %23 : vector<16x1xf32>
    %25 = arith.mulf %19, %19 : vector<16x1xf32>
    %26 = arith.subf %24, %25 : vector<16x1xf32>
    %27 = vector.broadcast %19 : vector<16x1xf32> to vector<16x64xf32>
    %28 = arith.subf %15, %27 : vector<16x64xf32>
    %cst_10 = arith.constant 9.99999974E-6 : f32
    %29 = vector.broadcast %cst_10 : f32 to vector<16x1xf32>
    %30 = arith.addf %26, %29 : vector<16x1xf32>
    %31 = math.rsqrt %30 : vector<16x1xf32>
    %32 = vector.broadcast %31 : vector<16x1xf32> to vector<16x64xf32>
    %33 = arith.mulf %28, %32 : vector<16x64xf32>
    %34 = vector.broadcast %2 : vector<1x64xf32> to vector<16x64xf32>
    %35 = arith.mulf %33, %34 : vector<16x64xf32>
    %36 = vector.broadcast %3 : vector<1x64xf32> to vector<16x64xf32>
    %37 = arith.addf %35, %36 : vector<16x64xf32>
    %38 = arith.truncf %37 : vector<16x64xf32> to vector<16x64xbf16>
    %c0_11 = arith.constant 0 : index
    %c0_12 = arith.constant 0 : index
    %39 = vector.load %arg3[%c0_11, %c0_12] : memref<64x64xbf16, #tpu.memory_space<vmem>>, vector<64x64xbf16>
    %cst_13 = arith.constant dense<0.000000e+00> : vector<16x64xf32>
    %40 = tpu.matmul %38, %39, %cst_13 {dimension_numbers = #tpu.dot_dimension_numbers<[1], [0], [0], [1], [0, 0, 1, 1], [], []>} : vector<16x64xbf16>, vector<64x64xbf16>, vector<16x64xf32> -> vector<16x64xf32>
    %41 = vector.broadcast %4 : vector<1x64xf32> to vector<16x64xf32>
    %42 = arith.addf %40, %41 : vector<16x64xf32>
    %cst_14 = arith.constant 0.000000e+00 : f32
    %43 = vector.broadcast %cst_14 : f32 to vector<16x64xf32>
    %44 = arith.maximumf %42, %43 : vector<16x64xf32>
    %cst_15 = arith.constant dense<0.000000e+00> : vector<16xf32>
    %45 = vector.multi_reduction <add>, %44, %cst_15 [1] : vector<16x64xf32> to vector<16xf32>
    %46 = vector.shape_cast %45 : vector<16xf32> to vector<16x1xf32>
    %cst_16 = arith.constant 6.400000e+01 : f32
    %47 = vector.broadcast %cst_16 : f32 to vector<16x1xf32>
    %48 = arith.divf %46, %47 : vector<16x1xf32>
    %49 = arith.mulf %44, %44 : vector<16x64xf32>
    %cst_17 = arith.constant dense<0.000000e+00> : vector<16xf32>
    %50 = vector.multi_reduction <add>, %49, %cst_17 [1] : vector<16x64xf32> to vector<16xf32>
    %51 = vector.shape_cast %50 : vector<16xf32> to vector<16x1xf32>
    %cst_18 = arith.constant 6.400000e+01 : f32
    %52 = vector.broadcast %cst_18 : f32 to vector<16x1xf32>
    %53 = arith.divf %51, %52 : vector<16x1xf32>
    %54 = arith.mulf %48, %48 : vector<16x1xf32>
    %55 = arith.subf %53, %54 : vector<16x1xf32>
    %56 = vector.broadcast %48 : vector<16x1xf32> to vector<16x64xf32>
    %57 = arith.subf %44, %56 : vector<16x64xf32>
    %cst_19 = arith.constant 9.99999974E-6 : f32
    %58 = vector.broadcast %cst_19 : f32 to vector<16x1xf32>
    %59 = arith.addf %55, %58 : vector<16x1xf32>
    %60 = math.rsqrt %59 : vector<16x1xf32>
    %61 = vector.broadcast %60 : vector<16x1xf32> to vector<16x64xf32>
    %62 = arith.mulf %57, %61 : vector<16x64xf32>
    %63 = vector.broadcast %5 : vector<1x64xf32> to vector<16x64xf32>
    %64 = arith.mulf %62, %63 : vector<16x64xf32>
    %65 = vector.broadcast %6 : vector<1x64xf32> to vector<16x64xf32>
    %66 = arith.addf %64, %65 : vector<16x64xf32>
    %67 = arith.truncf %66 : vector<16x64xf32> to vector<16x64xbf16>
    %c0_20 = arith.constant 0 : index
    %c0_21 = arith.constant 0 : index
    %68 = vector.load %arg4[%c0_20, %c0_21] : memref<64x16xbf16, #tpu.memory_space<vmem>>, vector<64x16xbf16>
    %cst_22 = arith.constant dense<0.000000e+00> : vector<16x16xf32>
    %69 = tpu.matmul %67, %68, %cst_22 {dimension_numbers = #tpu.dot_dimension_numbers<[1], [0], [0], [1], [0, 0, 1, 1], [], []>} : vector<16x64xbf16>, vector<64x16xbf16>, vector<16x16xf32> -> vector<16x16xf32>
    %70 = vector.broadcast %7 : vector<1x16xf32> to vector<16x16xf32>
    %71 = arith.addf %69, %70 : vector<16x16xf32>
    %c0_23 = arith.constant 0 : index
    %c0_24 = arith.constant 0 : index
    %72 = vector.load %arg6[%c0_23, %c0_24] : memref<16x16xf32, #tpu.memory_space<vmem>>, vector<16x16xf32>
    tpu.vector_store %arg6[%c0_23, %c0_24], %71 {strides = array<i32>} : memref<16x16xf32, #tpu.memory_space<vmem>>, vector<16x16xf32>,
    return
  }
  func.func @transform_0(%arg0: i32) -> (i32, i32) {
    %c0_i32 = arith.constant 0 : i32
    %c0_i32_0 = arith.constant 0 : i32
    return %arg0, %c0_i32 : i32, i32
  }
  func.func @transform_1(%arg0: i32) -> (i32, i32) {
    %c0_i32 = arith.constant 0 : i32
    %c0_i32_0 = arith.constant 0 : i32
    %c0_i32_1 = arith.constant 0 : i32
    return %c0_i32, %c0_i32_0 : i32, i32
  }
  func.func @transform_2(%arg0: i32) -> (i32, i32) {
    %c0_i32 = arith.constant 0 : i32
    %c0_i32_0 = arith.constant 0 : i32
    %c0_i32_1 = arith.constant 0 : i32
    return %c0_i32, %c0_i32_0 : i32, i32
  }
  func.func @transform_3(%arg0: i32) -> (i32, i32) {
    %c0_i32 = arith.constant 0 : i32
    %c0_i32_0 = arith.constant 0 : i32
    %c0_i32_1 = arith.constant 0 : i32
    return %c0_i32, %c0_i32_0 : i32, i32
  }
  func.func @transform_4(%arg0: i32) -> (i32, i32) {
    %c0_i32 = arith.constant 0 : i32
    %c0_i32_0 = arith.constant 0 : i32
    %c0_i32_1 = arith.constant 0 : i32
    return %c0_i32, %c0_i32_0 : i32, i32
  }
  func.func @transform_5(%arg0: i32) -> (i32, i32) {
    %c0_i32 = arith.constant 0 : i32
    %c0_i32_0 = arith.constant 0 : i32
    return %arg0, %c0_i32 : i32, i32
  }
}

</mosaic_0001>

<llo_original>
// kernel: mlp_forward.1
$region0: #{mlp_forward.1}
  #allocation0 [shape = 'u32[]', space=smem, size = 0x4, offset = 0x4, fixed_abs, tag = 'smem constant byte address 0x4 - core index']
  #allocation1 [shape = 'u32[72,128]{1,0:T(1,128)}', space=vmem, size = 0x9000, scoped, tag = 'internal scratch']
  %s0 = inlined_call_operand.hbm [shape: f32[16,32], index: 0, kind: input, shape index: {}]
  %s1 = inlined_call_operand.hbm [shape: bf16[32,64], index: 1, kind: input, shape index: {}]
  %s2 = inlined_call_operand.vmem [shape: bf16[64,64], index: 2, kind: input, shape index: {}]
  %s3 = inlined_call_operand.vmem [shape: bf16[64,16], index: 3, kind: input, shape index: {}]
  %s4 = inlined_call_operand.vmem [shape: f32[8,64], index: 4, kind: input, shape index: {}]
  %s5 = inlined_call_operand.hbm [shape: f32[16,16], index: 5, kind: output, shape index: {}]
  %s6 = sld [smem:[#allocation0]]
  $region38: #{mlp_forward.1} parent=0
    _
  %s8 = ssub.s32 1, %s6
  %s9 = scalar_select 0, %s8, %s6
  $region1: #{mlp_forward.1} parent=0
    #allocation2 [shape = 'u8[8192]{0}', space=vmem, size = 0x2000, scoped, tag = 'input window, operand 0, single buffered']
    #allocation3 [shape = 's32[1]{0}', space=sflag, size = 0x4, scoped, tag = 'scoped memory for mlp_forward.1']
    #allocation4 [shape = 's32[1]{0}', space=sflag, size = 0x4, scoped, tag = 'scoped memory for mlp_forward.1']
    #allocation5 [shape = 'u8[8192]{0}', space=vmem, size = 0x2000, scoped, tag = 'input window, operand 1, single buffered']
    #allocation6 [shape = 's32[1]{0}', space=sflag, size = 0x4, scoped, tag = 'scoped memory for mlp_forward.1']
    #allocation7 [shape = 'u8[8192]{0}', space=vmem, size = 0x2000, scoped, tag = 'output window, operand 0, single buffered']
    %10 = vsyncpa [#allocation3], 0
    %11 = vsyncpa [#allocation6], 0
    %12 = vsyncpa [#allocation4], 0
    // Predicated region
    $region2: #{mlp_forward.1} parent=1 // pred_check
      _
    $region3: #{mlp_forward.1} parent=1 // pred_check_branch
      %14 = sbr.rel (0) target = $region5
    $region4: #{mlp_forward.1} parent=1 // pred_region
      %16 = vsyncadd [#allocation3], 0
      %s17 = sshll.u32 %s0, 4
      %s18 = int_to_ptr.hbm [resolvable:$true] %s17
      %s19 = sshll.u32 [#allocation2], 4
      %s20 = int_to_ptr.vmem [resolvable:$true] %s19
      %25 = dma.hbm_to_vmem [thread:$0]  %s18, 256, %s20, [#allocation3], 128, 128, 8
    $region5: #{mlp_forward.1} parent=1 // pred_fallthru
      _
    // Predicated region
    $region6: #{mlp_forward.1} parent=1 // pred_check
      _
    $region7: #{mlp_forward.1} parent=1 // pred_check_branch
      %27 = sbr.rel (0) target = $region9
    $region8: #{mlp_forward.1} parent=1 // pred_region
      %29 = vsyncadd [#allocation6], 0
      %s30 = sshll.u32 %s1, 4
      %s31 = int_to_ptr.hbm [resolvable:$true] %s30
      %s32 = sshll.u32 [#allocation5], 4
      %s33 = int_to_ptr.vmem [resolvable:$true] %s32
      %38 = dma.hbm_to_vmem [thread:$0]  %s31, 256, %s33, [#allocation6], 64, 64, 4
    $region9: #{mlp_forward.1} parent=1 // pred_fallthru
      _
    // Predicated region
    $region10: #{mlp_forward.1} parent=1 // pred_check
      _
    $region11: #{mlp_forward.1} parent=1 // pred_check_branch
      %40 = sbr.rel (0) target = $region13
    $region12: #{mlp_forward.1} parent=1 // pred_region
      _
    $region13: #{mlp_forward.1} parent=1 // pred_fallthru
      _
    // Predicated region
    $region14: #{mlp_forward.1} parent=1 // pred_check
      _
    $region15: #{mlp_forward.1} parent=1 // pred_check_branch
      %42 = sbr.rel (0) target = $region17
    $region16: #{mlp_forward.1} parent=1 // pred_region
      _
    $region17: #{mlp_forward.1} parent=1 // pred_fallthru
      _
    // Predicated region
    $region18: #{mlp_forward.1} parent=1 // pred_check
      _
    $region19: #{mlp_forward.1} parent=1 // pred_check_branch
      %44 = sbr.rel (0) target = $region21
    $region20: #{mlp_forward.1} parent=1 // pred_region
      _
    $region21: #{mlp_forward.1} parent=1 // pred_fallthru
      _
    // Predicated region
    $region22: #{mlp_forward.1} parent=1 // pred_check
      _
    $region23: #{mlp_forward.1} parent=1 // pred_check_branch
      %46 = sbr.rel (0) target = $region25
    $region24: #{mlp_forward.1} parent=1 // pred_region
      %48 = dma.done [#allocation3], 256
    $region25: #{mlp_forward.1} parent=1 // pred_fallthru
      _
    // Predicated region
    $region26: #{mlp_forward.1} parent=1 // pred_check
      _
    $region27: #{mlp_forward.1} parent=1 // pred_check_branch
      %50 = sbr.rel (0) target = $region29
    $region28: #{mlp_forward.1} parent=1 // pred_region
      %52 = dma.done [#allocation6], 256
    $region29: #{mlp_forward.1} parent=1 // pred_fallthru
      _
    %v54 = vld [vmem:[%s4] sm:$0xff]
    %v55 = vld [vmem:[#allocation2] sm:$0xff]
    %v56 = vld [vmem:[#allocation2 + $0x8] sm:$0xff]
    %v57 = vpack.c.bf16 %v56, %v55
    %v58 = vld [vmem:[#allocation5] sm:$0xf]
    %v59 = vld [vmem:[#allocation5 + $0x4] sm:$0xf]
    %v60 = vld [vmem:[#allocation5 + $0x8] sm:$0xf]
    %v61 = vld [vmem:[#allocation5 + $0xc] sm:$0xf]
    %v62 = vperm.slane %v54, 0
    %v67 = vunpack.c.l.b16 %v58
    %v68 = vunpack.c.l.b16 %v59
    %v69 = vunpack.c.l.b16 %v60
    %v70 = vunpack.c.l.b16 %v61
    %v71 = vpack.c.b16 %v68, %v67
    %v72 = vpack.c.b16 %v70, %v69
    %vm75 = vcmask 261120
    %v77 = vsel %vm75, %v57, 0
    %79 = vmatpush.bf16.msra.mxu0 0
    %80 = vmatpush.bf16.msra.mxu0 0
    %81 = vmatpush.bf16.msra.mxu0 0
    %82 = vmatpush.bf16.msra.mxu0 0
    %83 = vmatpush.bf16.msra.mxu0 0
    %84 = vmatpush.bf16.msra.mxu0 0
    %85 = vmatpush.bf16.msra.mxu0 %v72
    %86 = vmatpush.bf16.msra.mxu0 %v71
    %87 = vmatmul.bf16.gmra.mxu0 %v77
    %v88 = vpop.f32.mrf.mxu0
    %v89 = vadd.f32 %v62, %v88
    %v90 = vpop.f32.mrf.mxu0
    %v91 = vadd.f32 %v62, %v90
    %92 = vdwg.mxu0
    %v93 = vmax.f32 %v89, 0.0
    %v94 = vmax.f32 %v91, 0.0
    %vm95 = vcmask 523264
    %v96 = vsel %vm95, %v93, 0.0
    %97 = vadd.xlane.f32.xlu0 %v96
    %v98 = vpop.xlane.xlu0 %97
    %v99 = vsel %vm95, %v94, 0.0
    %100 = vadd.xlane.f32.xlu0 %v99
    %v101 = vpop.xlane.xlu0 %100
    %v102 = vrcp.pop 64.0
    %v103 = vmul.f32 64.0, %v102
    %v104 = vsub.f32 1.0, %v103
    %v105 = vmul.f32 %v102, %v104
    %v106 = vadd.f32 %v102, %v105
    %vm107 = vweird.f32 %v102
    %v108 = vsel %vm107, %v102, %v106
    %v109 = vmul.f32 %v98, %v108
    %v110 = vmul.f32 %v101, %v108
    %v111 = vmul.f32 %v93, %v93
    %v112 = vmul.f32 %v94, %v94
    %v113 = vsel %vm95, %v111, 0.0
    %114 = vadd.xlane.f32.xlu0 %v113
    %v115 = vpop.xlane.xlu0 %114
    %v116 = vsel %vm95, %v112, 0.0
    %117 = vadd.xlane.f32.xlu0 %v116
    %v118 = vpop.xlane.xlu0 %117
    %v119 = vmul.f32 %v115, %v108
    %v120 = vmul.f32 %v118, %v108
    %v121 = vmul.f32 %v109, %v109
    %v122 = vmul.f32 %v110, %v110
    %v123 = vsub.f32 %v119, %v121
    %v124 = vsub.f32 %v120, %v122
    %v125 = vsub.f32 %v93, %v109
    %v126 = vsub.f32 %v94, %v110
    %v127 = vadd.f32 %v123, 1e-05
    %v128 = vadd.f32 %v124, 1e-05
    %v129 = vrsqrt.pop %v127
    %v130 = vmul.f32 %v129, %v127
    %v131 = vmul.f32 %v130, %v129
    %v132 = vmul.f32 0.5, %v131
    %v133 = vsub.f32 1.5, %v132
    %v134 = vmul.f32 %v129, %v133
    %vm135 = vweird.f32 %v127
    %vm136 = vweird.f32 %v129
    %vm137 = vmor %vm135, %vm136
    %v138 = vsel %vm137, %v129, %v134
    %v139 = vrsqrt.pop %v128
    %v140 = vmul.f32 %v139, %v128
    %v141 = vmul.f32 %v140, %v139
    %v142 = vmul.f32 0.5, %v141
    %v143 = vsub.f32 1.5, %v142
    %v144 = vmul.f32 %v139, %v143
    %vm145 = vweird.f32 %v128
    %vm146 = vweird.f32 %v139
    %vm147 = vmor %vm145, %vm146
    %v148 = vsel %vm147, %v139, %v144
    %v149 = vmul.f32 %v125, %v138
    %v150 = vmul.f32 %v126, %v148
    %v151 = vperm.slane %v54, 1
    %v152 = vmul.f32 %v149, %v151
    %v153 = vmul.f32 %v150, %v151
    %v154 = vperm.slane %v54, 2
    %v155 = vadd.f32 %v152, %v154
    %v156 = vadd.f32 %v153, %v154
    %v157 = vpack.c.bf16 %v156, %v155
    %v158 = vld [vmem:[%s2] sm:$0xf]
    %v159 = vld [vmem:[%s2 + $0x4] sm:$0xf]
    %v160 = vld [vmem:[%s2 + $0x8] sm:$0xf]
    %v161 = vld [vmem:[%s2 + $0xc] sm:$0xf]
    %v162 = vld [vmem:[%s2 + $0x10] sm:$0xf]
    %v163 = vld [vmem:[%s2 + $0x14] sm:$0xf]
    %v164 = vld [vmem:[%s2 + $0x18] sm:$0xf]
    %v165 = vld [vmem:[%s2 + $0x1c] sm:$0xf]
    %v166 = vperm.slane %v54, 3
    %v175 = vunpack.c.l.b16 %v158
    %v176 = vunpack.c.l.b16 %v159
    %v177 = vunpack.c.l.b16 %v160
    %v178 = vunpack.c.l.b16 %v161
    %v179 = vunpack.c.l.b16 %v162
    %v180 = vunpack.c.l.b16 %v163
    %v181 = vunpack.c.l.b16 %v164
    %v182 = vunpack.c.l.b16 %v165
    %v183 = vpack.c.b16 %v176, %v175
    %v184 = vpack.c.b16 %v178, %v177
    %v185 = vpack.c.b16 %v180, %v179
    %v186 = vpack.c.b16 %v182, %v181
    %v192 = vsel %vm95, %v157, 0
    %194 = vmatpush.bf16.msra.mxu0 0
    %195 = vmatpush.bf16.msra.mxu0 0
    %196 = vmatpush.bf16.msra.mxu0 0
    %197 = vmatpush.bf16.msra.mxu0 0
    %198 = vmatpush.bf16.msra.mxu0 %v186
    %199 = vmatpush.bf16.msra.mxu0 %v185
    %200 = vmatpush.bf16.msra.mxu0 %v184
    %201 = vmatpush.bf16.msra.mxu0 %v183
    %202 = vmatmul.bf16.gmra.mxu0 %v192
    %v203 = vpop.f32.mrf.mxu0
    %v204 = vadd.f32 %v166, %v203
    %v205 = vpop.f32.mrf.mxu0
    %v206 = vadd.f32 %v166, %v205
    %207 = vdwg.mxu0
    %v208 = vmax.f32 %v204, 0.0
    %v209 = vmax.f32 %v206, 0.0
    %v210 = vsel %vm95, %v208, 0.0
    %211 = vadd.xlane.f32.xlu0 %v210
    %v212 = vpop.xlane.xlu0 %211
    %v213 = vsel %vm95, %v209, 0.0
    %214 = vadd.xlane.f32.xlu0 %v213
    %v215 = vpop.xlane.xlu0 %214
    %v216 = vmul.f32 %v212, %v108
    %v217 = vmul.f32 %v215, %v108
    %v218 = vmul.f32 %v208, %v208
    %v219 = vmul.f32 %v209, %v209
    %v220 = vsel %vm95, %v218, 0.0
    %221 = vadd.xlane.f32.xlu0 %v220
    %v222 = vpop.xlane.xlu0 %221
    %v223 = vsel %vm95, %v219, 0.0
    %224 = vadd.xlane.f32.xlu0 %v223
    %v225 = vpop.xlane.xlu0 %224
    %v226 = vmul.f32 %v222, %v108
    %v227 = vmul.f32 %v225, %v108
    %v228 = vmul.f32 %v216, %v216
    %v229 = vmul.f32 %v217, %v217
    %v230 = vsub.f32 %v226, %v228
    %v231 = vsub.f32 %v227, %v229
    %v232 = vsub.f32 %v208, %v216
    %v233 = vsub.f32 %v209, %v217
    %v234 = vadd.f32 %v230, 1e-05
    %v235 = vadd.f32 %v231, 1e-05
    %v236 = vrsqrt.pop %v234
    %v237 = vmul.f32 %v236, %v234
    %v238 = vmul.f32 %v237, %v236
    %v239 = vmul.f32 0.5, %v238
    %v240 = vsub.f32 1.5, %v239
    %v241 = vmul.f32 %v236, %v240
    %vm242 = vweird.f32 %v234
    %vm243 = vweird.f32 %v236
    %vm244 = vmor %vm242, %vm243
    %v245 = vsel %vm244, %v236, %v241
    %v246 = vrsqrt.pop %v235
    %v247 = vmul.f32 %v246, %v235
    %v248 = vmul.f32 %v247, %v246
    %v249 = vmul.f32 0.5, %v248
    %v250 = vsub.f32 1.5, %v249
    %v251 = vmul.f32 %v246, %v250
    %vm252 = vweird.f32 %v235
    %vm253 = vweird.f32 %v246
    %vm254 = vmor %vm252, %vm253
    %v255 = vsel %vm254, %v246, %v251
    %v256 = vmul.f32 %v232, %v245
    %v257 = vmul.f32 %v233, %v255
    %v258 = vperm.slane %v54, 4
    %v259 = vmul.f32 %v256, %v258
    %v260 = vmul.f32 %v257, %v258
    %v261 = vperm.slane %v54, 5
    %v262 = vadd.f32 %v259, %v261
    %v263 = vadd.f32 %v260, %v261
    %v264 = vpack.c.bf16 %v263, %v262
    %v265 = vld [vmem:[%s3] sm:$0xf]
    %v266 = vld [vmem:[%s3 + $0x4] sm:$0xf]
    %v267 = vld [vmem:[%s3 + $0x8] sm:$0xf]
    %v268 = vld [vmem:[%s3 + $0xc] sm:$0xf]
    %v269 = vld [vmem:[%s3 + $0x10] sm:$0xf]
    %v270 = vld [vmem:[%s3 + $0x14] sm:$0xf]
    %v271 = vld [vmem:[%s3 + $0x18] sm:$0xf]
    %v272 = vld [vmem:[%s3 + $0x1c] sm:$0xf]
    %v273 = vperm.slane %v54, 6
    %v282 = vunpack.c.l.b16 %v265
    %v283 = vunpack.c.l.b16 %v266
    %v284 = vunpack.c.l.b16 %v267
    %v285 = vunpack.c.l.b16 %v268
    %v286 = vunpack.c.l.b16 %v269
    %v287 = vunpack.c.l.b16 %v270
    %v288 = vunpack.c.l.b16 %v271
    %v289 = vunpack.c.l.b16 %v272
    %v290 = vpack.c.b16 %v283, %v282
    %v291 = vpack.c.b16 %v285, %v284
    %v292 = vpack.c.b16 %v287, %v286
    %v293 = vpack.c.b16 %v289, %v288
    %v299 = vsel %vm95, %v264, 0
    %301 = vmatpush.bf16.msra.mxu0 0
    %302 = vmatpush.bf16.msra.mxu0 0
    %303 = vmatpush.bf16.msra.mxu0 0
    %304 = vmatpush.bf16.msra.mxu0 0
    %305 = vmatpush.bf16.msra.mxu0 %v293
    %306 = vmatpush.bf16.msra.mxu0 %v292
    %307 = vmatpush.bf16.msra.mxu0 %v291
    %308 = vmatpush.bf16.msra.mxu0 %v290
    %309 = vmatmul.bf16.gmra.mxu0 %v299
    %v310 = vpop.f32.mrf.mxu0
    %v311 = vadd.f32 %v273, %v310
    %v312 = vpop.f32.mrf.mxu0
    %v313 = vadd.f32 %v273, %v312
    %314 = vdwg.mxu0
    %vm315 = vcmask 130048
    %316 = vst.msk [vmem:[#allocation7] sm:$0xff] %vm315, %v311
    %317 = vst.msk [vmem:[#allocation7 + $0x8] sm:$0xff] %vm315, %v313
    // Predicated region
    $region30: #{mlp_forward.1} parent=1 // pred_check
      _
    $region31: #{mlp_forward.1} parent=1 // pred_check_branch
      %319 = sbr.rel (0) target = $region33
    $region32: #{mlp_forward.1} parent=1 // pred_region
      %321 = vsyncadd [#allocation4], 0
      %s322 = sshll.u32 [#allocation7], 4
      %s323 = int_to_ptr.vmem [resolvable:$true] %s322
      %s324 = sshll.u32 %s5, 4
      %s325 = int_to_ptr.hbm [resolvable:$true] %s324
      %330 = dma.vmem_to_hbm [thread:$0]  %s323, 256, %s325, [#allocation4], 128, 128, 8
    $region33: #{mlp_forward.1} parent=1 // pred_fallthru
      _
    // Predicated region
    $region34: #{mlp_forward.1} parent=1 // pred_check
      _
    $region35: #{mlp_forward.1} parent=1 // pred_check_branch
      %332 = sbr.rel (0) target = $region37
    $region36: #{mlp_forward.1} parent=1 // pred_region
      %334 = dma.done [#allocation4], 256
    $region37: #{mlp_forward.1} parent=1 // pred_fallthru
      _
    %335 = vsyncpa [#allocation3], 1
    %336 = vsyncpa [#allocation6], 1
    %337 = vsyncpa [#allocation4], 1

</llo_original>
